<compile_context>
chip_gen: v7x
topology: tpu7x:2x2x1
jax: 0.10.0
libtpu: 0.0.40
codegen_flags: <defaults>
</compile_context>

<pallas_src>
import functools

import numpy as np
import jax
import jax.numpy as jnp
from jax import lax
from jax.experimental import pallas as pl
from jax.experimental.pallas import tpu as pltpu

NEG_SLOPE = 0.01               # torch.nn.LeakyReLU default
PI = float(np.pi)
LANE = 128
SUB = 8
MLP_ROW_TILE = 2048            # input-MLP row tile (perf review: 1024-2048)
POOL_ROW_TILE = 2048           # pool reduction tile (multiple of 128)
VMEM_LIMIT = 32 * 1024 * 1024  # leaves headroom on v7x's 64 MiB physical VMEM

_VMEM = pl.BlockSpec(memory_space=pltpu.MemorySpace.VMEM)
_SMEM = pl.BlockSpec(memory_space=pltpu.MemorySpace.SMEM)
_ANY = pl.BlockSpec(memory_space=pl.ANY)


def _rup(n, m):
    return ((n + m - 1) // m) * m


def _rows_and_tile(n, max_tile, min_steps=1):
    """Padded row count + a row tile (multiple of 8) that divides it.

    min_steps=2 guarantees >=2 grid steps so a 'parallel' axis feeds both
    TensorCores on v7x (negligible extra grid-step cost on v5e/v6e)."""
    r = _rup(max(int(n), 1), SUB)
    if min_steps > 1:
        r2 = _rup(r, SUB * min_steps)
        if r2 // min_steps <= max_tile:
            return r2, r2 // min_steps
    if r <= max_tile:
        return r, r
    r = _rup(r, max_tile)
    return r, max_tile


# ----------------------------- Pallas kernels ------------------------------

def _input_mlp_kernel(x_ref, w1_ref, b1_ref, w2_ref, b2_ref, o32_ref, o16_ref):
    # Both input MLPs fused (block-diagonal weights):
    #   Linear -> LeakyReLU -> (eval dropout = id) -> Linear -> tanh*pi.
    # No masking epilogue: values outside each branch's logical block (pad
    # rows, cross-branch columns) are harmless downstream because every
    # consumer multiplies them by zero-padded rows/cols of later weight
    # matrices or by a {0,1} pool indicator, so they never reach the logits.
    h = jnp.dot(x_ref[...], w1_ref[...],
                preferred_element_type=jnp.float32) + b1_ref[...]
    h = jnp.where(h >= 0.0, h, NEG_SLOPE * h)                    # f32 epilogue
    y = jnp.dot(h.astype(jnp.bfloat16), w2_ref[...],
                preferred_element_type=jnp.float32) + b2_ref[...]
    y = jnp.tanh(y) * PI
    o32_ref[...] = y
    o16_ref[...] = y.astype(jnp.bfloat16)        # bf16 shadow for the pool stream


def _update_scatter_kernel(centers_ref, agg_ref, u_ref, w1_ref, b1_ref, w2_ref,
                           b2_ref, xf32_hbm, xb16_hbm, of32_hbm, ob16_hbm,
                           rows32, rows16, sems, *, n_uniq):
    # Per-hop update MLP + index_add(0, centers, updates) + residual, touching
    # only the S center rows of the HBM-resident node slab (and its bf16
    # shadow).  xb16_hbm is the aliased bf16 input ref (unused; write-only).
    del xb16_hbm
    h = jnp.dot(u_ref[...], w1_ref[...],
                preferred_element_type=jnp.float32) + b1_ref[...]
    h = jnp.where(h >= 0.0, h, NEG_SLOPE * h)
    upd = jnp.dot(h.astype(jnp.bfloat16), w2_ref[...],
                  preferred_element_type=jnp.float32) + b2_ref[...]
    # Duplicate-center aggregation (exact index_add semantics) as one tiny
    # f32 matmul instead of S serialized single-row RMW stores.
    agg_upd = jnp.dot(agg_ref[...], upd, preferred_element_type=jnp.float32)

    # Gather only the touched rows from HBM (512 B each), add, write back the
    # f32 rows and their bf16 shadow.  Residual is implicit: untouched rows of
    # the aliased output buffers keep their values.
    gathers = []
    for u in range(n_uniq):
        c = centers_ref[u]
        cp = pltpu.make_async_copy(xf32_hbm.at[pl.ds(c, 1), :],
                                   rows32.at[pl.ds(u, 1), :], sems.at[0, u])
        cp.start()
        gathers.append(cp)
    for cp in gathers:
        cp.wait()

    new = rows32[...] + agg_upd
    rows32[...] = new
    rows16[...] = new.astype(jnp.bfloat16)

    writes = []
    for u in range(n_uniq):
        c = centers_ref[u]
        cp32 = pltpu.make_async_copy(rows32.at[pl.ds(u, 1), :],
                                     of32_hbm.at[pl.ds(c, 1), :], sems.at[1, u])
        cp16 = pltpu.make_async_copy(rows16.at[pl.ds(u, 1), :],
                                     ob16_hbm.at[pl.ds(c, 1), :], sems.at[2, u])
        cp32.start()
        cp16.start()
        writes.append(cp32)
        writes.append(cp16)
    for cp in writes:
        cp.wait()


def _pool_head_kernel(p_ref, x_ref, invc_ref, w1_ref, b1_ref, w2_ref, b2_ref,
                      o_ref, acc_ref):
    # global_mean_pool = exact {0,1} indicator sum on the MXU (K-tiled over the
    # node axis, bf16 stream) * f32 1/count in the last-step epilogue, then the
    # graph_head MLP.
    k = pl.program_id(0)

    @pl.when(k == 0)
    def _():
        acc_ref[...] = jnp.zeros_like(acc_ref)

    acc_ref[...] += jnp.dot(p_ref[...], x_ref[...],
                            preferred_element_type=jnp.float32)

    @pl.when(k == pl.num_programs(0) - 1)
    def _():
        pooled = acc_ref[...] * invc_ref[...]                 # mean, f32 exact
        h = jnp.dot(pooled.astype(jnp.bfloat16), w1_ref[...],
                    preferred_element_type=jnp.float32) + b1_ref[...]
        h = jnp.where(h >= 0.0, h, NEG_SLOPE * h)
        o_ref[...] = jnp.dot(h.astype(jnp.bfloat16), w2_ref[...],
                             preferred_element_type=jnp.float32) + b2_ref[...]


# ----------------------------- kernel wrappers ------------------------------

def input_mlps(x_comb, w1, b1, w2, b2, row_tile):
    rows, din = x_comb.shape
    dh, dout = w1.shape[1], w2.shape[1]
    grid = (rows // row_tile,)
    flops = int(2 * rows * din * dh + 2 * rows * dh * dout)
    bytes_acc = int(x_comb.size * 2 + w1.size * 2 + w2.size * 2
                    + (b1.size + b2.size) * 4 + rows * dout * 6)
    return pl.pallas_call(
        _input_mlp_kernel,
        grid=grid,
        in_specs=[
            pl.BlockSpec((row_tile, din), lambda i: (i, 0)),
            pl.BlockSpec((din, dh), lambda i: (0, 0)),
            pl.BlockSpec((1, dh), lambda i: (0, 0)),
            pl.BlockSpec((dh, dout), lambda i: (0, 0)),
            pl.BlockSpec((1, dout), lambda i: (0, 0)),
        ],
        out_specs=(pl.BlockSpec((row_tile, dout), lambda i: (i, 0)),
                   pl.BlockSpec((row_tile, dout), lambda i: (i, 0))),
        out_shape=(jax.ShapeDtypeStruct((rows, dout), jnp.float32),
                   jax.ShapeDtypeStruct((rows, dout), jnp.bfloat16)),
        compiler_params=pltpu.CompilerParams(
            dimension_semantics=("parallel",), vmem_limit_bytes=VMEM_LIMIT),
        cost_estimate=pl.CostEstimate(flops=flops,
                                      transcendentals=int(rows * dout),
                                      bytes_accessed=bytes_acc),
    )(x_comb, w1, b1, w2, b2)


def update_and_scatter(uniq_centers, agg, upd_in, w1, b1, w2, b2,
                       node_f32, node_b16, *, n_uniq):
    n_pad, d_pad = node_f32.shape
    u_pad, s_pad = agg.shape
    din, dh = w1.shape
    dout = w2.shape[1]
    flops = int(2 * s_pad * din * dh + 2 * s_pad * dh * dout
                + 2 * u_pad * s_pad * dout)
    bytes_acc = int(upd_in.size * 2 + agg.size * 4 + w1.size * 2 + w2.size * 2
                    + (b1.size + b2.size) * 4 + n_uniq * d_pad * (4 + 4 + 2))
    return pl.pallas_call(
        functools.partial(_update_scatter_kernel, n_uniq=n_uniq),
        in_specs=[_SMEM, _VMEM, _VMEM, _VMEM, _VMEM, _VMEM, _VMEM, _ANY, _ANY],
        out_specs=(_ANY, _ANY),
        out_shape=(jax.ShapeDtypeStruct((n_pad, d_pad), jnp.float32),
                   jax.ShapeDtypeStruct((n_pad, d_pad), jnp.bfloat16)),
        input_output_aliases={7: 0, 8: 1},     # node slabs updated in place (HBM)
        scratch_shapes=[pltpu.VMEM((u_pad, d_pad), jnp.float32),
                        pltpu.VMEM((u_pad, d_pad), jnp.bfloat16),
                        pltpu.SemaphoreType.DMA((3, u_pad))],
        compiler_params=pltpu.CompilerParams(vmem_limit_bytes=VMEM_LIMIT),
        cost_estimate=pl.CostEstimate(flops=flops, transcendentals=0,
                                      bytes_accessed=bytes_acc),
    )(uniq_centers, agg, upd_in, w1, b1, w2, b2, node_f32, node_b16)


def pool_and_head(pool_ind, x_b16, inv_count, w1, b1, w2, b2, n_tile):
    g_pad, n_pad = pool_ind.shape
    d_pad = x_b16.shape[1]
    dh, dout = w1.shape[1], w2.shape[1]
    grid = (n_pad // n_tile,)
    flops = int(2 * g_pad * n_pad * d_pad + 2 * g_pad * d_pad * dh
                + 2 * g_pad * dh * dout)
    bytes_acc = int(pool_ind.size * 2 + x_b16.size * 2 + w1.size * 2
                    + w2.size * 2 + (b1.size + b2.size + inv_count.size) * 4
                    + g_pad * dout * 4)
    return pl.pallas_call(
        _pool_head_kernel,
        grid=grid,
        in_specs=[
            pl.BlockSpec((g_pad, n_tile), lambda k: (0, k)),
            pl.BlockSpec((n_tile, d_pad), lambda k: (k, 0)),
            pl.BlockSpec((g_pad, 1), lambda k: (0, 0)),
            pl.BlockSpec((d_pad, dh), lambda k: (0, 0)),
            pl.BlockSpec((1, dh), lambda k: (0, 0)),
            pl.BlockSpec((dh, dout), lambda k: (0, 0)),
            pl.BlockSpec((1, dout), lambda k: (0, 0)),
        ],
        out_specs=pl.BlockSpec((g_pad, dout), lambda k: (0, 0)),
        out_shape=jax.ShapeDtypeStruct((g_pad, dout), jnp.float32),
        scratch_shapes=[pltpu.VMEM((g_pad, d_pad), jnp.float32)],
        compiler_params=pltpu.CompilerParams(
            dimension_semantics=("arbitrary",), vmem_limit_bytes=VMEM_LIMIT),
        cost_estimate=pl.CostEstimate(flops=flops, transcendentals=0,
                                      bytes_accessed=bytes_acc),
    )(pool_ind, x_b16, inv_count, w1, b1, w2, b2)


# ------------------ PennyLane circuit simulated in plain JAX ------------------
# TODO(synk): the qml QNode has no Pallas equivalent; it is simulated exactly
# with a small statevector in plain JAX (9 wires for graphlet_size=4).

def _ry(t):
    c = jnp.cos(0.5 * t).astype(jnp.complex64)
    s = jnp.sin(0.5 * t).astype(jnp.complex64)
    return jnp.stack([jnp.stack([c, -s]), jnp.stack([s, c])])


def _rz(t):
    em = jnp.exp(-0.5j * t).astype(jnp.complex64)
    ep = jnp.exp(0.5j * t).astype(jnp.complex64)
    z = jnp.zeros((), jnp.complex64)
    return jnp.stack([jnp.stack([em, z]), jnp.stack([z, ep])])


def _rx(t):
    c = jnp.cos(0.5 * t).astype(jnp.complex64)
    s = (-1j * jnp.sin(0.5 * t)).astype(jnp.complex64)
    return jnp.stack([jnp.stack([c, s]), jnp.stack([s, c])])


def _rot(phi, theta, omega):  # PennyLane Rot = RZ(phi), RY(theta), RZ(omega)
    return _rz(omega) @ _ry(theta) @ _rz(phi)


def _apply_1q(state, u, w):
    state = jnp.moveaxis(state, w, 0)
    shp = state.shape
    state = (u @ state.reshape(2, -1)).reshape(shp)
    return jnp.moveaxis(state, 0, w)


def _apply_ctrl(state, u, ctrl, tgt):
    state = jnp.moveaxis(state, (ctrl, tgt), (0, 1))
    shp = state.shape
    s0, s1 = state[0], state[1]
    s1 = (u @ s1.reshape(2, -1)).reshape(s1.shape)
    state = jnp.stack([s0, s1]).reshape(shp)
    return jnp.moveaxis(state, (0, 1), (ctrl, tgt))


_CNOT_X = np.array([[0.0, 1.0], [1.0, 0.0]], dtype=np.complex64)


def _sel(state, weights, wires):
    """qml.StronglyEntanglingLayers: Rot on every wire then a CNOT ring per layer."""
    n_layers, n_wires = weights.shape[0], len(wires)
    for l in range(n_layers):
        for i, w in enumerate(wires):
            state = _apply_1q(state, _rot(weights[l, i, 0], weights[l, i, 1],
                                          weights[l, i, 2]), w)
        if n_wires > 1:
            r = (l % (n_wires - 1)) + 1
            for i in range(n_wires):
                state = _apply_ctrl(state, jnp.asarray(_CNOT_X),
                                    wires[i], wires[(i + r) % n_wires])
    return state


def qgcn_circuit(inputs, spreadlayer, strong, twodesign, inits, update):
    feat = inputs.reshape(-1, 2)
    total = feat.shape[0]
    num_nodes = (total + 1) // 2
    num_edges = num_nodes - 1
    adjacency, vertex = feat[:num_edges], feat[num_edges:]
    num_qbit = spreadlayer.shape[1]
    num_nodes_qbit = (num_qbit + 1) // 2
    center = num_nodes_qbit - 1
    n_wires = num_qbit + 2
    state = jnp.zeros((2,) * n_wires, jnp.complex64).at[(0,) * n_wires].set(1.0)
    for i in range(num_edges):
        state = _apply_1q(state, _ry(adjacency[i, 0]), i)
        state = _apply_1q(state, _rz(adjacency[i, 1]), i)
    for i in range(num_nodes):
        state = _apply_1q(state, _ry(vertex[i, 0]), center + i)
        state = _apply_1q(state, _rz(vertex[i, 1]), center + i)
    for i in range(num_edges):
        edge, neighbor, a1, a2 = i, center + i + 1, num_qbit, num_qbit + 1
        state = _apply_ctrl(state, _rx(inits[0, 0]), neighbor, a1)
        state = _apply_ctrl(state, _ry(inits[0, 1]), edge, a1)
        state = _apply_ctrl(state, _rz(inits[0, 2]), neighbor, a2)
        state = _apply_ctrl(state, _ry(inits[0, 3]), edge, a2)
        state = _sel(state, strong[0], [edge, neighbor, a1])
        state = _sel(state, strong[1], [a1, neighbor, a2])
    state = _sel(state, update[0], [center, num_qbit, num_qbit + 1])
    x_state = jnp.flip(state, axis=center)          # PauliX on center wire
    return jnp.real(jnp.vdot(state, x_state)).astype(jnp.float32)


# ------------------------------- host glue ---------------------------------

def star_subgraph(adj, subgraph_size):
    # TODO(synk): star_subgraph is not provided in the reference; deterministic
    # surrogate: for every node with enough neighbors, take the first k-1
    # (sorted) neighbors as one star subgraph.
    subs = []
    for c in range(adj.shape[0]):
        nbrs = sorted(np.nonzero(adj[c])[0].tolist())
        if len(nbrs) >= subgraph_size - 1:
            subs.append([c] + nbrs[: subgraph_size - 1])
    return subs


def prepare_params(params):
    """Pad + cast weights ONCE (bf16 matmul operands, f32 biases)."""
    w1n, b1n, w2n, b2n = params["input_node"]
    w1e, b1e, w2e, b2e = params["input_edge"]
    dn, hid = int(w1n.shape[0]), int(w1n.shape[1])
    de = int(w1e.shape[0])
    fd, pd = int(w2n.shape[1]), int(w2e.shape[1])
    H = _rup(hid, LANE)
    DIN = _rup(dn + de, LANE)
    DOUT = _rup(fd + pd, LANE)
    assert DOUT == LANE, "final_dim + pqc_dim must fit one 128-lane tile"

    # Block-diagonal combined weights so both input MLPs run in one kernel.
    w1c = np.zeros((DIN, 2 * H), np.float32)
    w1c[:dn, :hid] = np.asarray(w1n, np.float32)
    w1c[dn:dn + de, H:H + hid] = np.asarray(w1e, np.float32)
    b1c = np.zeros((1, 2 * H), np.float32)
    b1c[0, :hid] = np.asarray(b1n, np.float32)[0]
    b1c[0, H:H + hid] = np.asarray(b1e, np.float32)[0]
    w2c = np.zeros((2 * H, DOUT), np.float32)
    w2c[:hid, :fd] = np.asarray(w2n, np.float32)
    w2c[H:H + hid, fd:fd + pd] = np.asarray(w2e, np.float32)
    b2c = np.zeros((1, DOUT), np.float32)
    b2c[0, :fd] = np.asarray(b2n, np.float32)[0]
    b2c[0, fd:fd + pd] = np.asarray(b2e, np.float32)[0]

    def _padnp(a, r, c):
        a = np.asarray(a, np.float32)
        out = np.zeros((r, c), np.float32)
        out[:a.shape[0], :a.shape[1]] = a
        return out

    def dense2_pad(w1, b1, w2, b2):
        din_, dh_ = int(w1.shape[0]), int(w1.shape[1])
        dout_ = int(w2.shape[1])
        DIN_, DH_, DOUT_ = _rup(din_, LANE), _rup(dh_, LANE), _rup(dout_, LANE)
        return (jnp.asarray(_padnp(w1, DIN_, DH_), jnp.bfloat16),
                jnp.asarray(_padnp(b1, 1, DH_), jnp.float32),
                jnp.asarray(_padnp(w2, DH_, DOUT_), jnp.bfloat16),
                jnp.asarray(_padnp(b2, 1, DOUT_), jnp.float32))

    upd = []
    i = 1
    while f"upd_lay{i}" in params:
        upd.append(dense2_pad(*params[f"upd_lay{i}"]))
        i += 1
    pqc_out = int(params["upd_lay1"][0].shape[0]) - pd
    num_classes = int(params["graph_head"][2].shape[1])

    return {
        "dims": dict(node_dim=dn, edge_dim=de, hidden=hid, final_dim=fd,
                     pqc_dim=pd, pqc_out=pqc_out, num_classes=num_classes),
        "input_comb": (jnp.asarray(w1c, jnp.bfloat16), jnp.asarray(b1c),
                       jnp.asarray(w2c, jnp.bfloat16), jnp.asarray(b2c)),
        "graph_head": dense2_pad(*params["graph_head"]),
        "upd": upd,
        "quantum": params["quantum"],
    }


def qgnn_forward(prep, node_feat, edge_attr, edge_index, batch,
                 graphlet_size=4, hop_neighbor=1):
    d = prep["dims"]
    dn, de = d["node_dim"], d["edge_dim"]
    fd, pd, pqc_out = d["final_dim"], d["pqc_dim"], d["pqc_out"]
    num_classes = d["num_classes"]

    edge_index_t = np.asarray(edge_index).T                    # (E, 2) like .t()
    num_nodes = int(node_feat.shape[0])
    num_edges = int(edge_attr.shape[0])

    N_pad, n_tile = _rows_and_tile(num_nodes, POOL_ROW_TILE)   # persistent node slab
    E_pad = _rup(num_edges, SUB)
    ROWS, row_tile = _rows_and_tile(N_pad + E_pad, MLP_ROW_TILE, min_steps=2)

    # Combined input built on-device: node rows [0, N_pad) carry node feats in
    # cols [0, dn), edge rows [N_pad, N_pad+E) carry edge feats in cols [dn, dn+de).
    DIN = int(prep["input_comb"][0].shape[0])
    x_comb = jnp.zeros((ROWS, DIN), jnp.bfloat16)
    x_comb = lax.dynamic_update_slice(
        x_comb, jnp.asarray(node_feat, jnp.bfloat16), (0, 0))
    x_comb = lax.dynamic_update_slice(
        x_comb, jnp.asarray(edge_attr, jnp.bfloat16), (N_pad, dn))

    feat32, feat16 = input_mlps(x_comb, *prep["input_comb"], row_tile)
    node_f32 = feat32[:N_pad]                        # (N_pad, 128) f32 node slab
    node_b16 = feat16[:N_pad]                        # bf16 shadow (pool stream)
    edge_features = feat32[N_pad:N_pad + num_edges, fd:fd + pd]   # (E, pqc_dim)

    idx_dict = {(int(u), int(v)): i for i, (u, v) in enumerate(edge_index_t.tolist())}
    adj = np.zeros((num_nodes, num_nodes), dtype=np.int32)
    adj[edge_index_t[:, 0], edge_index_t[:, 1]] = 1
    adj[edge_index_t[:, 1], edge_index_t[:, 0]] = 1

    qw = prep["quantum"]
    for hop in range(hop_neighbor):
        subgraphs = star_subgraph(adj, graphlet_size)
        if not subgraphs:
            continue
        sub_arr = np.asarray(subgraphs, np.int32)                 # (S, g)
        centers_np = sub_arr[:, 0]
        S = int(sub_arr.shape[0])
        e_idx = np.asarray(
            [[idx_dict[(min(int(sub[0]), int(nb)), max(int(sub[0]), int(nb)))]
              for nb in sub[1:]] for sub in subgraphs], np.int32)  # (S, g-1)

        # One batched gather per array (no per-subgraph device-dispatch loop).
        n_feat = node_f32[jnp.asarray(sub_arr)][:, :, :fd]         # (S, g, fd)
        e_feat = edge_features[jnp.asarray(e_idx)]                 # (S, g-1, pd)
        q_in = jnp.concatenate([e_feat.reshape(S, -1),
                                n_feat.reshape(S, -1)], axis=1)
        all_msg = jax.vmap(lambda inp: qgcn_circuit(
            inp, qw["spreadlayer"], qw["strong"], qw["twodesign"],
            qw["inits"], qw["update"]))(q_in)                      # (S,), pqc_out == 1

        S_pad = _rup(S, SUB)
        # Update-MLP input in padded 128-wide form: cols [0, fd) = center node
        # features, cols [fd, fd+pqc_out) = quantum message.
        upd_in = node_f32[jnp.asarray(centers_np)]
        upd_in = upd_in.at[:, fd:fd + pqc_out].set(
            all_msg.reshape(S, pqc_out).astype(jnp.float32))
        upd_in = jnp.pad(upd_in, ((0, S_pad - S), (0, 0))).astype(jnp.bfloat16)

        # Host-side grouping by unique center -> index_add with duplicate
        # centers becomes one tiny in-kernel matmul (agg @ upd).
        uniq, inv = np.unique(centers_np, return_inverse=True)
        U = int(uniq.shape[0])
        U_pad = _rup(U, SUB)
        agg = np.zeros((U_pad, S_pad), np.float32)
        agg[inv, np.arange(S)] = 1.0
        uniq_pad = np.zeros((U_pad,), np.int32)
        uniq_pad[:U] = uniq

        # NOTE: nn.LayerNorm is constructed in the reference module but never
        # applied in forward, so it is intentionally omitted here.
        node_f32, node_b16 = update_and_scatter(
            jnp.asarray(uniq_pad), jnp.asarray(agg), upd_in,
            *prep["upd"][hop], node_f32, node_b16, n_uniq=U)

    b = np.asarray(batch)
    num_graphs = int(b.max()) + 1
    G_pad = _rup(num_graphs, SUB)
    counts = np.bincount(b, minlength=num_graphs).astype(np.float32)
    pool_ind = np.zeros((G_pad, N_pad), np.float32)
    pool_ind[b, np.arange(num_nodes)] = 1.0        # {0,1} indicator (exact in bf16)
    inv_count = np.zeros((G_pad, 1), np.float32)
    inv_count[:num_graphs, 0] = 1.0 / counts

    out = pool_and_head(jnp.asarray(pool_ind, jnp.bfloat16), node_b16,
                        jnp.asarray(inv_count), *prep["graph_head"], n_tile)
    return out[:num_graphs, :num_classes]


# --------------------------- deterministic init -----------------------------

def dense2_init(key, din, dh, dout):
    k = jax.random.split(key, 4)
    l1, l2 = 1.0 / np.sqrt(din), 1.0 / np.sqrt(dh)
    return (jax.random.uniform(k[0], (din, dh), jnp.float32, -l1, l1),
            jax.random.uniform(k[1], (1, dh), jnp.float32, -l1, l1),
            jax.random.uniform(k[2], (dh, dout), jnp.float32, -l2, l2),
            jax.random.uniform(k[3], (1, dout), jnp.float32, -l2, l2))


if __name__ == "__main__":
    key = jax.random.PRNGKey(0)
    keys = jax.random.split(key, 12)

    node_input_dim, edge_input_dim = 3, 2
    hidden, pqc_dim, final_dim, pqc_out, num_classes = 128, 2, 2, 1, 2
    graphlet_size, hop_neighbor = 4, 1
    num_qbit = 2 * graphlet_size - 1                     # 7 -> 9 wires incl. ancillas

    params = {
        "input_node": dense2_init(keys[0], node_input_dim, hidden, final_dim),
        "input_edge": dense2_init(keys[1], edge_input_dim, hidden, pqc_dim),
        "upd_lay1":   dense2_init(keys[2], pqc_dim + pqc_out, hidden, pqc_dim),
        "graph_head": dense2_init(keys[3], final_dim, num_classes, num_classes),
        "quantum": {   # uniform_pi_init: U[0, pi]
            "spreadlayer": jax.random.uniform(keys[4], (1, num_qbit), jnp.float32, 0.0, PI),
            "strong":      jax.random.uniform(keys[5], (2, 1, 3, 3), jnp.float32, 0.0, PI),
            "twodesign":   jax.random.uniform(keys[6], (1, 1, 2), jnp.float32, 0.0, PI),
            "inits":       jax.random.uniform(keys[7], (1, 4), jnp.float32, 0.0, PI),
            "update":      jax.random.uniform(keys[8], (1, 1, 3, 3), jnp.float32, 0.0, PI),
        },
    }
    prep = prepare_params(params)

    # Two 4-node star graphs (centers 0 and 4); edges stored (u < v) as (2, E).
    edge_index = np.array([[0, 0, 0, 4, 4, 4],
                           [1, 2, 3, 5, 6, 7]], dtype=np.int32)
    node_feat = jax.random.normal(keys[9], (8, node_input_dim), jnp.float32)
    edge_attr = jax.random.normal(keys[10], (6, edge_input_dim), jnp.float32)
    batch = np.array([0, 0, 0, 0, 1, 1, 1, 1], dtype=np.int32)

    out = qgnn_forward(prep, node_feat, edge_attr, edge_index, batch,
                       graphlet_size=graphlet_size, hop_neighbor=hop_neighbor)
    jax.block_until_ready(out)
    assert out.shape == (2, num_classes)
    print("KERNEL_OK")
</pallas_src>

<mosaic_0001>
module attributes {stable_mosaic.version = 11 : i64} {
  func.func @_input_mlp_kernel(%arg0: i32, %arg1: memref<8x128xbf16, #tpu.memory_space<vmem>>, %arg2: memref<128x256xbf16, #tpu.memory_space<vmem>>, %arg3: memref<1x256xf32, #tpu.memory_space<vmem>>, %arg4: memref<256x128xbf16, #tpu.memory_space<vmem>>, %arg5: memref<1x128xf32, #tpu.memory_space<vmem>>, %arg6: memref<8x128xf32, #tpu.memory_space<vmem>>, %arg7: memref<8x128xbf16, #tpu.memory_space<vmem>>) attributes {dimension_semantics = [#tpu.dimension_semantics<parallel>], iteration_bounds = array<i64: 2>, scalar_prefetch = 0 : i64, scratch_operands = 0 : i64, tpu.core_type = #tpu.core_type<tc>, window_params = [{transform_indices = @transform_0, window_bounds = array<i64: 8, 128>}, {pipeline_mode = #tpu.pipeline_mode<synchronous>, transform_indices = @transform_1, window_bounds = array<i64: 128, 256>}, {pipeline_mode = #tpu.pipeline_mode<synchronous>, transform_indices = @transform_2, window_bounds = array<i64: 1, 256>}, {pipeline_mode = #tpu.pipeline_mode<synchronous>, transform_indices = @transform_3, window_bounds = array<i64: 256, 128>}, {pipeline_mode = #tpu.pipeline_mode<synchronous>, transform_indices = @transform_4, window_bounds = array<i64: 1, 128>}, {transform_indices = @transform_5, window_bounds = array<i64: 8, 128>}, {transform_indices = @transform_6, window_bounds = array<i64: 8, 128>}]} {
    %c0 = arith.constant 0 : index
    %c0_0 = arith.constant 0 : index
    %0 = vector.load %arg1[%c0, %c0_0] : memref<8x128xbf16, #tpu.memory_space<vmem>>, vector<8x128xbf16>
    %c0_1 = arith.constant 0 : index
    %c0_2 = arith.constant 0 : index
    %1 = vector.load %arg2[%c0_1, %c0_2] : memref<128x256xbf16, #tpu.memory_space<vmem>>, vector<128x256xbf16>
    %cst = arith.constant dense<0.000000e+00> : vector<8x256xf32>
    %2 = tpu.matmul %0, %1, %cst {dimension_numbers = #tpu.dot_dimension_numbers<[1], [0], [0], [1], [0, 0, 1, 1], [], []>} : vector<8x128xbf16>, vector<128x256xbf16>, vector<8x256xf32> -> vector<8x256xf32>
    %c0_3 = arith.constant 0 : index
    %c0_4 = arith.constant 0 : index
    %3 = vector.load %arg3[%c0_3, %c0_4] : memref<1x256xf32, #tpu.memory_space<vmem>>, vector<1x256xf32>
    %4 = vector.broadcast %3 : vector<1x256xf32> to vector<8x256xf32>
    %5 = arith.addf %2, %4 : vector<8x256xf32>
    %cst_5 = arith.constant 0.000000e+00 : f32
    %6 = vector.broadcast %cst_5 : f32 to vector<8x256xf32>
    %7 = arith.cmpf oge, %5, %6 : vector<8x256xf32>
    %cst_6 = arith.constant 0.00999999977 : f32
    %8 = vector.broadcast %cst_6 : f32 to vector<8x256xf32>
    %9 = arith.mulf %8, %5 : vector<8x256xf32>
    %10 = arith.select %7, %5, %9 : vector<8x256xi1>, vector<8x256xf32>
    %11 = arith.truncf %10 : vector<8x256xf32> to vector<8x256xbf16>
    %c0_7 = arith.constant 0 : index
    %c0_8 = arith.constant 0 : index
    %12 = vector.load %arg4[%c0_7, %c0_8] : memref<256x128xbf16, #tpu.memory_space<vmem>>, vector<256x128xbf16>
    %cst_9 = arith.constant dense<0.000000e+00> : vector<8x128xf32>
    %13 = tpu.matmul %11, %12, %cst_9 {dimension_numbers = #tpu.dot_dimension_numbers<[1], [0], [0], [1], [0, 0, 1, 1], [], []>} : vector<8x256xbf16>, vector<256x128xbf16>, vector<8x128xf32> -> vector<8x128xf32>
    %c0_10 = arith.constant 0 : index
    %c0_11 = arith.constant 0 : index
    %14 = vector.load %arg5[%c0_10, %c0_11] : memref<1x128xf32, #tpu.memory_space<vmem>>, vector<1x128xf32>
    %15 = vector.broadcast %14 : vector<1x128xf32> to vector<8x128xf32>
    %16 = arith.addf %13, %15 : vector<8x128xf32>
    %17 = math.tanh %16 : vector<8x128xf32>
    %cst_12 = arith.constant 3.14159274 : f32
    %18 = vector.broadcast %cst_12 : f32 to vector<8x128xf32>
    %19 = arith.mulf %17, %18 : vector<8x128xf32>
    %c0_13 = arith.constant 0 : index
    %c0_14 = arith.constant 0 : index
    %20 = vector.load %arg6[%c0_13, %c0_14] : memref<8x128xf32, #tpu.memory_space<vmem>>, vector<8x128xf32>
    tpu.vector_store %arg6[%c0_13, %c0_14], %19 {strides = array<i32>} : memref<8x128xf32, #tpu.memory_space<vmem>>, vector<8x128xf32>,
    %21 = arith.truncf %19 : vector<8x128xf32> to vector<8x128xbf16>
    %c0_15 = arith.constant 0 : index
    %c0_16 = arith.constant 0 : index
    %22 = vector.load %arg7[%c0_15, %c0_16] : memref<8x128xbf16, #tpu.memory_space<vmem>>, vector<8x128xbf16>
    tpu.vector_store %arg7[%c0_15, %c0_16], %21 {strides = array<i32>} : memref<8x128xbf16, #tpu.memory_space<vmem>>, vector<8x128xbf16>,
    return
  }
  func.func @transform_0(%arg0: i32) -> (i32, i32) {
    %c0_i32 = arith.constant 0 : i32
    %c0_i32_0 = arith.constant 0 : i32
    return %arg0, %c0_i32 : i32, i32
  }
  func.func @transform_1(%arg0: i32) -> (i32, i32) {
    %c0_i32 = arith.constant 0 : i32
    %c0_i32_0 = arith.constant 0 : i32
    %c0_i32_1 = arith.constant 0 : i32
    return %c0_i32, %c0_i32_0 : i32, i32
  }
  func.func @transform_2(%arg0: i32) -> (i32, i32) {
    %c0_i32 = arith.constant 0 : i32
    %c0_i32_0 = arith.constant 0 : i32
    %c0_i32_1 = arith.constant 0 : i32
    return %c0_i32, %c0_i32_0 : i32, i32
  }
  func.func @transform_3(%arg0: i32) -> (i32, i32) {
    %c0_i32 = arith.constant 0 : i32
    %c0_i32_0 = arith.constant 0 : i32
    %c0_i32_1 = arith.constant 0 : i32
    return %c0_i32, %c0_i32_0 : i32, i32
  }
  func.func @transform_4(%arg0: i32) -> (i32, i32) {
    %c0_i32 = arith.constant 0 : i32
    %c0_i32_0 = arith.constant 0 : i32
    %c0_i32_1 = arith.constant 0 : i32
    return %c0_i32, %c0_i32_0 : i32, i32
  }
  func.func @transform_5(%arg0: i32) -> (i32, i32) {
    %c0_i32 = arith.constant 0 : i32
    %c0_i32_0 = arith.constant 0 : i32
    return %arg0, %c0_i32 : i32, i32
  }
  func.func @transform_6(%arg0: i32) -> (i32, i32) {
    %c0_i32 = arith.constant 0 : i32
    %c0_i32_0 = arith.constant 0 : i32
    return %arg0, %c0_i32 : i32, i32
  }
}

</mosaic_0001>

<llo_original>
// kernel: tpu_custom_call.1
$region0: #{tpu_custom_call.1}
  #allocation0 [shape = 'u32[]', space=smem, size = 0x4, offset = 0x4, fixed_abs, tag = 'smem constant byte address 0x4 - core index']
  #allocation1 [shape = 'u32[144,128]{1,0:T(1,128)}', space=vmem, size = 0x12000, scoped, tag = 'internal scratch']
  %s0 = inlined_call_operand.hbm [shape: bf16[16,128], index: 0, kind: input, shape index: {}]
  %s1 = inlined_call_operand.hbm [shape: bf16[128,256], index: 1, kind: input, shape index: {}]
  %s2 = inlined_call_operand.vmem [shape: f32[1,256], index: 2, kind: input, shape index: {}]
  %s3 = inlined_call_operand.hbm [shape: bf16[256,128], index: 3, kind: input, shape index: {}]
  %s4 = inlined_call_operand.vmem [shape: f32[1,128], index: 4, kind: input, shape index: {}]
  %s5 = inlined_call_operand.hbm [shape: f32[16,128], index: 5, kind: output, shape index: {0}]
  %s6 = inlined_call_operand.hbm [shape: bf16[16,128], index: 6, kind: output, shape index: {1}]
  %7 = xla_tuple %s5, %s6
  %s8 = sld [smem:[#allocation0]]
  $region73: #{tpu_custom_call.1} parent=0
    _
  %s10 = ssub.s32 1, %s8
  %s11 = scalar_select 0, %s10, %s8
  $region1: #{tpu_custom_call.1} parent=0
    #allocation2 [shape = 'u8[4096]{0}', space=vmem, size = 0x1000, scoped, tag = 'input window, operand 0']
    #allocation3 [shape = 's32[2]{0}', space=sflag, size = 0x8, scoped, tag = 'scoped memory for tpu_custom_call.1']
    #allocation4 [shape = 's32[2]{0}', space=sflag, size = 0x8, scoped, tag = 'scoped memory for tpu_custom_call.1']
    #allocation5 [shape = 'u8[65536]{0}', space=vmem, size = 0x10000, scoped, tag = 'input window, operand 1, single buffered']
    #allocation6 [shape = 's32[1]{0}', space=sflag, size = 0x4, scoped, tag = 'scoped memory for tpu_custom_call.1']
    #allocation7 [shape = 'u8[65536]{0}', space=vmem, size = 0x10000, scoped, tag = 'input window, operand 3, single buffered']
    #allocation8 [shape = 'u8[8192]{0}', space=vmem, size = 0x2000, scoped, tag = 'output window, operand 0']
    #allocation9 [shape = 'u8[4096]{0}', space=vmem, size = 0x1000, scoped, tag = 'output window, operand 1']
    #allocation10 [shape = 's32[2]{0}', space=sflag, size = 0x8, scoped, tag = 'scoped memory for tpu_custom_call.1']
    %12 = vsyncpa [#allocation3], 0
    %s13 = scalar_lea.sflag [#allocation3], 1
    %14 = vsyncpa %s13, 0
    %15 = vsyncpa [#allocation6], 0
    %16 = vsyncpa [#allocation4], 0
    %s17 = scalar_lea.sflag [#allocation4], 1
    %18 = vsyncpa %s17, 0
    %19 = vsyncpa [#allocation10], 0
    %s20 = scalar_lea.sflag [#allocation10], 1
    %21 = vsyncpa %s20, 0
    loop: start=0, step=1, limit=4
    $region2: #{tpu_custom_call.1} parent=1 // loop_pre_header
      _
    $region3: #{tpu_custom_call.1} parent=1 // loop_header
      %s23 = sphi 0, %s27
      %p24 = scmp.ge.s32.totalorder %s23, 4
      %s33 = sphi 0, %s35
      %s36 = sphi 0, %s33
      %s37 = sphi 0, %s36
      %s53 = sphi 0, %s37
      %s57 = sphi 0, %s57
      %s59 = sphi 0, %s57
      %s60 = sphi 0, %s59
      %s74 = sphi 0, %s60
      %s78 = sphi 0, %s78
      %s80 = sphi 0, %s78
      %s81 = sphi 0, %s80
      %s95 = sphi 0, %s81
      %s99 = sphi 0, %s99
      %s101 = sphi 0, %s99
      %s102 = sphi 0, %s101
      %s116 = sphi 0, %s102
      %s120 = sphi 0, %s120
      %s122 = sphi 0, %s120
      %s123 = sphi 0, %s122
      %s137 = sphi 0, %s123
      %s143 = sphi 0, %s145
      %s146 = sphi 0, %s143
      %s147 = sphi 0, %s146
      %s163 = sphi 0, %s147
      %s169 = sphi 0, %s171
      %s172 = sphi 0, %s169
      %s173 = sphi 0, %s172
      %s189 = sphi 0, %s173
    $region4: #{tpu_custom_call.1} parent=1 // loop_header_branch
      %26 = sbr.rel (%p24) target = $region8
    $region5: #{tpu_custom_call.1} parent=1 // loop_body
      %s28 = ssub.s32 %s23, 1
      %s29 = ssub.s32 %s23, 2
      %s30 = sadd.s32 %s23, 1
      %s31 = ssub.s32 %s23, %s30
      %p32 = scmp.eq.s32.totalorder %s31, 0
      %s34 = sadd.s32 %s33, 1
      %s35 = scalar_select %p32, %s33, %s34
      %p38 = pneg %p32
      %p39 = scmp.eq.s32.totalorder %s23, 1
      %p40 = por %p38, %p39
      %p41 = scmp.ne.s32.totalorder %s33, %s36
      %p42 = scmp.eq.s32.totalorder %s23, 0
      %p43 = por %p41, %p42
      %p44 = scmp.ne.s32.totalorder %s33, %s36
      %p45 = scmp.eq.s32.totalorder %s28, 1
      %p46 = por %p44, %p45
      %p47 = scmp.ne.s32.totalorder %s36, %s37
      %p48 = scmp.eq.s32.totalorder %s28, 0
      %p49 = por %p47, %p48
      %p50 = scmp.ne.s32.totalorder %s36, %s37
      %p51 = scmp.eq.s32.totalorder %s29, 1
      %p52 = por %p50, %p51
      %p54 = scmp.ne.s32.totalorder %s37, %s53
      %p55 = scmp.eq.s32.totalorder %s29, 0
      %p56 = por %p54, %p55
      %s58 = sadd.s32 %s57, 1
      %p61 = scmp.eq.s32.totalorder %s23, 1
      %p62 = scmp.ne.s32.totalorder %s57, %s59
      %p63 = scmp.eq.s32.totalorder %s23, 0
      %p64 = por %p62, %p63
      %p65 = scmp.ne.s32.totalorder %s57, %s59
      %p66 = scmp.eq.s32.totalorder %s28, 1
      %p67 = por %p65, %p66
      %p68 = scmp.ne.s32.totalorder %s59, %s60
      %p69 = scmp.eq.s32.totalorder %s28, 0
      %p70 = por %p68, %p69
      %p71 = scmp.ne.s32.totalorder %s59, %s60
      %p72 = scmp.eq.s32.totalorder %s29, 1
      %p73 = por %p71, %p72
      %p75 = scmp.ne.s32.totalorder %s60, %s74
      %p76 = scmp.eq.s32.totalorder %s29, 0
      %p77 = por %p75, %p76
      %s79 = sadd.s32 %s78, 1
      %p82 = scmp.eq.s32.totalorder %s23, 1
      %p83 = scmp.ne.s32.totalorder %s78, %s80
      %p84 = scmp.eq.s32.totalorder %s23, 0
      %p85 = por %p83, %p84
      %p86 = scmp.ne.s32.totalorder %s78, %s80
      %p87 = scmp.eq.s32.totalorder %s28, 1
      %p88 = por %p86, %p87
      %p89 = scmp.ne.s32.totalorder %s80, %s81
      %p90 = scmp.eq.s32.totalorder %s28, 0
      %p91 = por %p89, %p90
      %p92 = scmp.ne.s32.totalorder %s80, %s81
      %p93 = scmp.eq.s32.totalorder %s29, 1
      %p94 = por %p92, %p93
      %p96 = scmp.ne.s32.totalorder %s81, %s95
      %p97 = scmp.eq.s32.totalorder %s29, 0
      %p98 = por %p96, %p97
      %s100 = sadd.s32 %s99, 1
      %p103 = scmp.eq.s32.totalorder %s23, 1
      %p104 = scmp.ne.s32.totalorder %s99, %s101
      %p105 = scmp.eq.s32.totalorder %s23, 0
      %p106 = por %p104, %p105
      %p107 = scmp.ne.s32.totalorder %s99, %s101
      %p108 = scmp.eq.s32.totalorder %s28, 1
      %p109 = por %p107, %p108
      %p110 = scmp.ne.s32.totalorder %s101, %s102
      %p111 = scmp.eq.s32.totalorder %s28, 0
      %p112 = por %p110, %p111
      %p113 = scmp.ne.s32.totalorder %s101, %s102
      %p114 = scmp.eq.s32.totalorder %s29, 1
      %p115 = por %p113, %p114
      %p117 = scmp.ne.s32.totalorder %s102, %s116
      %p118 = scmp.eq.s32.totalorder %s29, 0
      %p119 = por %p117, %p118
      %s121 = sadd.s32 %s120, 1
      %p124 = scmp.eq.s32.totalorder %s23, 1
      %p125 = scmp.ne.s32.totalorder %s120, %s122
      %p126 = scmp.eq.s32.totalorder %s23, 0
      %p127 = por %p125, %p126
      %p128 = scmp.ne.s32.totalorder %s120, %s122
      %p129 = scmp.eq.s32.totalorder %s28, 1
      %p130 = por %p128, %p129
      %p131 = scmp.ne.s32.totalorder %s122, %s123
      %p132 = scmp.eq.s32.totalorder %s28, 0
      %p133 = por %p131, %p132
      %p134 = scmp.ne.s32.totalorder %s122, %s123
      %p135 = scmp.eq.s32.totalorder %s29, 1
      %p136 = por %p134, %p135
      %p138 = scmp.ne.s32.totalorder %s123, %s137
      %p139 = scmp.eq.s32.totalorder %s29, 0
      %p140 = por %p138, %p139
      %s141 = ssub.s32 %s23, %s30
      %p142 = scmp.eq.s32.totalorder %s141, 0
      %s144 = sadd.s32 %s143, 1
      %s145 = scalar_select %p142, %s143, %s144
      %p148 = pneg %p142
      %p149 = scmp.eq.s32.totalorder %s23, 1
      %p150 = por %p148, %p149
      %p151 = scmp.ne.s32.totalorder %s143, %s146
      %p152 = scmp.eq.s32.totalorder %s23, 0
      %p153 = por %p151, %p152
      %p154 = scmp.ne.s32.totalorder %s143, %s146
      %p155 = scmp.eq.s32.totalorder %s28, 1
      %p156 = por %p154, %p155
      %p157 = scmp.ne.s32.totalorder %s146, %s147
      %p158 = scmp.eq.s32.totalorder %s28, 0
      %p159 = por %p157, %p158
      %p160 = scmp.ne.s32.totalorder %s146, %s147
      %p161 = scmp.eq.s32.totalorder %s29, 1
      %p162 = por %p160, %p161
      %p164 = scmp.ne.s32.totalorder %s147, %s163
      %p165 = scmp.eq.s32.totalorder %s29, 0
      %p166 = por %p164, %p165
      %s167 = ssub.s32 %s23, %s30
      %p168 = scmp.eq.s32.totalorder %s167, 0
      %s170 = sadd.s32 %s169, 1
      %s171 = scalar_select %p168, %s169, %s170
      %p174 = pneg %p168
      %p175 = scmp.eq.s32.totalorder %s23, 1
      %p176 = por %p174, %p175
      %p177 = scmp.ne.s32.totalorder %s169, %s172
      %p178 = scmp.eq.s32.totalorder %s23, 0
      %p179 = por %p177, %p178
      %p180 = scmp.ne.s32.totalorder %s169, %s172
      %p181 = scmp.eq.s32.totalorder %s28, 1
      %p182 = por %p180, %p181
      %p183 = scmp.ne.s32.totalorder %s172, %s173
      %p184 = scmp.eq.s32.totalorder %s28, 0
      %p185 = por %p183, %p184
      %p186 = scmp.ne.s32.totalorder %s172, %s173
      %p187 = scmp.eq.s32.totalorder %s29, 1
      %p188 = por %p186, %p187
      %p190 = scmp.ne.s32.totalorder %s173, %s189
      %p191 = scmp.eq.s32.totalorder %s29, 0
      %p192 = por %p190, %p191
      %p193 = scmp.le.s32.totalorder 1, %s23
      %p194 = scmp.lt.s32.totalorder %s23, 3
      %p195 = pnand %p193, %p194
      %p196 = pneg %p195
      // Predicated region
      $region9: #{tpu_custom_call.1} parent=5 // pred_check
        _
      $region10: #{tpu_custom_call.1} parent=5 // pred_check_branch
        %198 = sbr.rel (%p195) target = $region12
      $region11: #{tpu_custom_call.1} parent=5 // pred_region
        %s199 = ssub.s32 %s23, 1
        // Predicated region
        $region13: #{tpu_custom_call.1} parent=11 // pred_check
          %p200 = pneg %p70
        $region14: #{tpu_custom_call.1} parent=11 // pred_check_branch
          %202 = sbr.rel (%p200) target = $region16
        $region15: #{tpu_custom_call.1} parent=11 // pred_region
          %s204 = ssub.s32 2048, 2048
          %205 = vsyncadd [#allocation6], %s204
          %s206 = sshll.u32 [#allocation5], 4
          %s207 = int_to_ptr.vmem [resolvable:$true] %s206
          %212 = dma.hbm_to_vmem [thread:$0]  %s1, 2048, %s207, [#allocation6], 128, 128, 8
        $region16: #{tpu_custom_call.1} parent=11 // pred_fallthru
          _
        // Predicated region
        $region17: #{tpu_custom_call.1} parent=11 // pred_check
          %p213 = pneg %p91
        $region18: #{tpu_custom_call.1} parent=11 // pred_check_branch
          %215 = sbr.rel (%p213) target = $region20
        $region19: #{tpu_custom_call.1} parent=11 // pred_region
          _
        $region20: #{tpu_custom_call.1} parent=11 // pred_fallthru
          _
        // Predicated region
        $region21: #{tpu_custom_call.1} parent=11 // pred_check
          %p216 = pneg %p112
        $region22: #{tpu_custom_call.1} parent=11 // pred_check_branch
          %218 = sbr.rel (%p216) target = $region24
        $region23: #{tpu_custom_call.1} parent=11 // pred_region
          %s220 = ssub.s32 2048, 2048
          %221 = vsyncadd [#allocation6], %s220
          %s222 = sshll.u32 [#allocation7], 4
          %s223 = int_to_ptr.vmem [resolvable:$true] %s222
          %228 = dma.hbm_to_vmem [thread:$0]  %s3, 2048, %s223, [#allocation6], 64, 64, 4
        $region24: #{tpu_custom_call.1} parent=11 // pred_fallthru
          _
        // Predicated region
        $region25: #{tpu_custom_call.1} parent=11 // pred_check
          %p229 = pneg %p133
        $region26: #{tpu_custom_call.1} parent=11 // pred_check_branch
          %231 = sbr.rel (%p229) target = $region28
        $region27: #{tpu_custom_call.1} parent=11 // pred_region
          _
        $region28: #{tpu_custom_call.1} parent=11 // pred_fallthru
          _
      $region12: #{tpu_custom_call.1} parent=5 // pred_fallthru
        _
      %p232 = scmp.lt.s32.totalorder %s23, 2
      // Predicated region
      $region29: #{tpu_custom_call.1} parent=5 // pred_check
        %p233 = pneg %p232
      $region30: #{tpu_custom_call.1} parent=5 // pred_check_branch
        %235 = sbr.rel (%p233) target = $region32
      $region31: #{tpu_custom_call.1} parent=5 // pred_region
        // Predicated region
        $region33: #{tpu_custom_call.1} parent=31 // pred_check
          %p236 = pneg %p43
        $region34: #{tpu_custom_call.1} parent=31 // pred_check_branch
          %238 = sbr.rel (%p236) target = $region36
        $region35: #{tpu_custom_call.1} parent=31 // pred_region
          %s239 = sand.u32 %s33, 1
          %s240 = scalar_lea.sflag [#allocation3], %s239
          %s241 = sand.u32 %s33, 1
          %s242 = smul.addr %s241, 4
          %s243 = scalar_lea.vmem [#allocation2], %s242
          %s245 = ssub.s32 64, 64
          %246 = vsyncadd %s240, %s245
          %s247 = smul.addr %s23, 64
          %s248 = scalar_lea.hbm %s0, %s247
          %s250 = sshll.u32 %s243, 4
          %s251 = int_to_ptr.vmem [resolvable:$true] %s250
          %253 = dma.hbm_to_vmem [thread:$0]  %s248, 64, %s251, %s240
        $region36: #{tpu_custom_call.1} parent=31 // pred_fallthru
          _
      $region32: #{tpu_custom_call.1} parent=5 // pred_fallthru
        _
      %p254 = scmp.le.s32.totalorder 1, %s23
      %p255 = scmp.lt.s32.totalorder %s23, 3
      %p256 = pnand %p254, %p255
      %p257 = pneg %p256
      // Predicated region
      $region37: #{tpu_custom_call.1} parent=5 // pred_check
        _
      $region38: #{tpu_custom_call.1} parent=5 // pred_check_branch
        %259 = sbr.rel (%p256) target = $region40
      $region39: #{tpu_custom_call.1} parent=5 // pred_region
        %s260 = ssub.s32 %s23, 1
        %s261 = sand.u32 %s36, 1
        %s262 = scalar_lea.sflag [#allocation3], %s261
        %s263 = sand.u32 %s36, 1
        %s264 = smul.addr %s263, 4
        %s265 = scalar_lea.vmem [#allocation2], %s264
        // Predicated region
        $region41: #{tpu_custom_call.1} parent=39 // pred_check
          %p266 = pneg %p49
        $region42: #{tpu_custom_call.1} parent=39 // pred_check_branch
          %268 = sbr.rel (%p266) target = $region44
        $region43: #{tpu_custom_call.1} parent=39 // pred_region
          %269 = dma.done %s262, 64
        $region44: #{tpu_custom_call.1} parent=39 // pred_fallthru
          _
        // Predicated region
        $region45: #{tpu_custom_call.1} parent=39 // pred_check
          %p270 = pneg %p70
        $region46: #{tpu_custom_call.1} parent=39 // pred_check_branch
          %272 = sbr.rel (%p270) target = $region48
        $region47: #{tpu_custom_call.1} parent=39 // pred_region
          %273 = dma.done [#allocation6], 2048
        $region48: #{tpu_custom_call.1} parent=39 // pred_fallthru
          _
        // Predicated region
        $region49: #{tpu_custom_call.1} parent=39 // pred_check
          %p274 = pneg %p112
        $region50: #{tpu_custom_call.1} parent=39 // pred_check_branch
          %276 = sbr.rel (%p274) target = $region52
        $region51: #{tpu_custom_call.1} parent=39 // pred_region
          %277 = dma.done [#allocation6], 2048
        $region52: #{tpu_custom_call.1} parent=39 // pred_fallthru
          _
        %s278 = sand.u32 %s36, 1
        %s279 = scalar_lea.sflag [#allocation3], %s278
        %s280 = sand.u32 %s36, 1
        %s281 = smul.addr %s280, 4
        %s282 = scalar_lea.vmem [#allocation2], %s281
        %p283 = pneg %p49
        %p284 = pneg %p46
        %p285 = pneg %p70
        %p286 = pneg %p67
        %p287 = pneg %p91
        %p288 = pneg %p88
        %p289 = pneg %p112
        %p290 = pneg %p109
        %p291 = pneg %p133
        %p292 = pneg %p130
        %p293 = pneg %p159
        %p294 = pneg %p156
        %s295 = sand.u32 %s146, 1
        %s296 = scalar_lea.sflag [#allocation4], %s295
        %s297 = sand.u32 %s146, 1
        %s298 = smul.addr %s297, 8
        %s299 = scalar_lea.vmem [#allocation8], %s298
        %p300 = pneg %p185
        %p301 = pneg %p182
        %s302 = sand.u32 %s172, 1
        %s303 = scalar_lea.sflag [#allocation10], %s302
        %s304 = sand.u32 %s172, 1
        %s305 = smul.addr %s304, 4
        %s306 = scalar_lea.vmem [#allocation9], %s305
        %v308 = vld [vmem:[%s265] sm:$0xf]
        %v309 = vld [vmem:[#allocation5] sm:$0xff]
        %v310 = vld [vmem:[#allocation5 + $0x8] sm:$0xff]
        %v311 = vld [vmem:[#allocation5 + $0x10] sm:$0xff]
        %v312 = vld [vmem:[#allocation5 + $0x18] sm:$0xff]
        %v313 = vld [vmem:[#allocation5 + $0x20] sm:$0xff]
        %v314 = vld [vmem:[#allocation5 + $0x28] sm:$0xff]
        %v315 = vld [vmem:[#allocation5 + $0x30] sm:$0xff]
        %v316 = vld [vmem:[#allocation5 + $0x38] sm:$0xff]
        %v317 = vld [vmem:[#allocation5 + $0x40] sm:$0xff]
        %v318 = vld [vmem:[#allocation5 + $0x48] sm:$0xff]
        %v319 = vld [vmem:[#allocation5 + $0x50] sm:$0xff]
        %v320 = vld [vmem:[#allocation5 + $0x58] sm:$0xff]
        %v321 = vld [vmem:[#allocation5 + $0x60] sm:$0xff]
        %v322 = vld [vmem:[#allocation5 + $0x68] sm:$0xff]
        %v323 = vld [vmem:[#allocation5 + $0x70] sm:$0xff]
        %v324 = vld [vmem:[#allocation5 + $0x78] sm:$0xff]
        %v325 = vld [vmem:[%s2] sm:$0x3]
        %v327 = vlaneseq
        %v328 = vshrl.u32 %v327, 7
        %v329 = vsub.s32 0, %v328
        %v330 = vrot.slane %v325, %v329
        %v331 = vlaneseq
        %v332 = vshrl.u32 %v331, 7
        %v333 = vsub.s32 1, %v332
        %v334 = vrot.slane %v325, %v333
        %v353 = vunpack.c.l.b16 %v309
        %v354 = vunpack.c.h.b16 %v309
        %v355 = vunpack.c.l.b16 %v310
        %v356 = vunpack.c.h.b16 %v310
        %v357 = vunpack.c.l.b16 %v311
        %v358 = vunpack.c.h.b16 %v311
        %v359 = vunpack.c.l.b16 %v312
        %v360 = vunpack.c.h.b16 %v312
        %v361 = vunpack.c.l.b16 %v313
        %v362 = vunpack.c.h.b16 %v313
        %v363 = vunpack.c.l.b16 %v314
        %v364 = vunpack.c.h.b16 %v314
        %v365 = vunpack.c.l.b16 %v315
        %v366 = vunpack.c.h.b16 %v315
        %v367 = vunpack.c.l.b16 %v316
        %v368 = vunpack.c.h.b16 %v316
        %v369 = vunpack.c.l.b16 %v317
        %v370 = vunpack.c.h.b16 %v317
        %v371 = vunpack.c.l.b16 %v318
        %v372 = vunpack.c.h.b16 %v318
        %v373 = vunpack.c.l.b16 %v319
        %v374 = vunpack.c.h.b16 %v319
        %v375 = vunpack.c.l.b16 %v320
        %v376 = vunpack.c.h.b16 %v320
        %v377 = vunpack.c.l.b16 %v321
        %v378 = vunpack.c.h.b16 %v321
        %v379 = vunpack.c.l.b16 %v322
        %v380 = vunpack.c.h.b16 %v322
        %v381 = vunpack.c.l.b16 %v323
        %v382 = vunpack.c.h.b16 %v323
        %v383 = vunpack.c.l.b16 %v324
        %v384 = vunpack.c.h.b16 %v324
        %v385 = vpack.c.b16 %v355, %v353
        %v386 = vpack.c.b16 %v356, %v354
        %v387 = vpack.c.b16 %v359, %v357
        %v388 = vpack.c.b16 %v360, %v358
        %v389 = vpack.c.b16 %v363, %v361
        %v390 = vpack.c.b16 %v364, %v362
        %v391 = vpack.c.b16 %v367, %v365
        %v392 = vpack.c.b16 %v368, %v366
        %v393 = vpack.c.b16 %v371, %v369
        %v394 = vpack.c.b16 %v372, %v370
        %v395 = vpack.c.b16 %v375, %v373
        %v396 = vpack.c.b16 %v376, %v374
        %v397 = vpack.c.b16 %v379, %v377
        %v398 = vpack.c.b16 %v380, %v378
        %v399 = vpack.c.b16 %v383, %v381
        %v400 = vpack.c.b16 %v384, %v382
        %417 = vmatprep.subr.bf16.mxu0 %v386
        %418 = vmatpush1.bf16.msra.mxu0 %v385
        %419 = vmatprep.subr.bf16.mxu0 %v388
        %420 = vmatpush1.bf16.msra.mxu0 %v387
        %421 = vmatprep.subr.bf16.mxu0 %v390
        %422 = vmatpush1.bf16.msra.mxu0 %v389
        %423 = vmatprep.subr.bf16.mxu0 %v392
        %424 = vmatpush1.bf16.msra.mxu0 %v391
        %425 = vmatprep.subr.bf16.mxu0 %v394
        %426 = vmatpush1.bf16.msra.mxu0 %v393
        %427 = vmatprep.subr.bf16.mxu0 %v396
        %428 = vmatpush1.bf16.msra.mxu0 %v395
        %429 = vmatprep.subr.bf16.mxu0 %v398
        %430 = vmatpush1.bf16.msra.mxu0 %v397
        %431 = vmatprep.subr.bf16.mxu0 %v400
        %432 = vmatpush1.bf16.msra.mxu0 %v399
        %433 = vmatprep.subr.bf16.mxu0 0
        %434 = vmatpush1.bf16.msra.mxu0 0
        %435 = vmatprep.subr.bf16.mxu0 0
        %436 = vmatpush1.bf16.msra.mxu0 0
        %437 = vmatprep.subr.bf16.mxu0 0
        %438 = vmatpush1.bf16.msra.mxu0 0
        %439 = vmatprep.subr.bf16.mxu0 0
        %440 = vmatpush1.bf16.msra.mxu0 0
        %441 = vmatprep.subr.bf16.mxu0 0
        %442 = vmatpush1.bf16.msra.mxu0 0
        %443 = vmatprep.subr.bf16.mxu0 0
        %444 = vmatpush1.bf16.msra.mxu0 0
        %445 = vmatprep.subr.bf16.mxu0 0
        %446 = vmatpush1.bf16.msra.mxu0 0
        %447 = vmatprep.subr.bf16.mxu0 0
        %448 = vmatpush1.bf16.msra.mxu0 0
        %449 = vmatprep.mubr.bf16.mxu0 0
        %450 = vmatmul.mubr.bf16.gmra.mrb[0].mxu0 %v308
        %v451 = vpop.f32.mrb[0].mxu0
        %v452 = vadd.f32 %v330, %v451
        %v453 = vpop.f32.mrb[0].mxu0
        %v454 = vadd.f32 %v334, %v453
        %v455 = vpop.f32.mrb[0].mxu0
        %v456 = vpop.f32.mrb[0].mxu0
        %457 = vdwg.mxu0
        %vm458 = vcmp.ge.f32.partialorder %v452, 0.0
        %vm459 = vcmp.ge.f32.partialorder %v454, 0.0
        %v460 = vmul.f32 %v452, 0.01
        %v461 = vmul.f32 %v454, 0.01
        %v462 = vsel %vm458, %v452, %v460
        %v463 = vsel %vm459, %v454, %v461
        %v464 = vpack.c.bf16 %v462, %v462
        %v465 = vpack.c.bf16 %v463, %v463
        %v466 = vld [vmem:[#allocation7] sm:$0xf]
        %v467 = vld [vmem:[#allocation7 + $0x4] sm:$0xf]
        %v468 = vld [vmem:[#allocation7 + $0x8] sm:$0xf]
        %v469 = vld [vmem:[#allocation7 + $0xc] sm:$0xf]
        %v470 = vld [vmem:[#allocation7 + $0x10] sm:$0xf]
        %v471 = vld [vmem:[#allocation7 + $0x14] sm:$0xf]
        %v472 = vld [vmem:[#allocation7 + $0x18] sm:$0xf]
        %v473 = vld [vmem:[#allocation7 + $0x1c] sm:$0xf]
        %v474 = vld [vmem:[#allocation7 + $0x20] sm:$0xf]
        %v475 = vld [vmem:[#allocation7 + $0x24] sm:$0xf]
        %v476 = vld [vmem:[#allocation7 + $0x28] sm:$0xf]
        %v477 = vld [vmem:[#allocation7 + $0x2c] sm:$0xf]
        %v478 = vld [vmem:[#allocation7 + $0x30] sm:$0xf]
        %v479 = vld [vmem:[#allocation7 + $0x34] sm:$0xf]
        %v480 = vld [vmem:[#allocation7 + $0x38] sm:$0xf]
        %v481 = vld [vmem:[#allocation7 + $0x3c] sm:$0xf]
        %v482 = vld [vmem:[#allocation7 + $0x40] sm:$0xf]
        %v483 = vld [vmem:[#allocation7 + $0x44] sm:$0xf]
        %v484 = vld [vmem:[#allocation7 + $0x48] sm:$0xf]
        %v485 = vld [vmem:[#allocation7 + $0x4c] sm:$0xf]
        %v486 = vld [vmem:[#allocation7 + $0x50] sm:$0xf]
        %v487 = vld [vmem:[#allocation7 + $0x54] sm:$0xf]
        %v488 = vld [vmem:[#allocation7 + $0x58] sm:$0xf]
        %v489 = vld [vmem:[#allocation7 + $0x5c] sm:$0xf]
        %v490 = vld [vmem:[#allocation7 + $0x60] sm:$0xf]
        %v491 = vld [vmem:[#allocation7 + $0x64] sm:$0xf]
        %v492 = vld [vmem:[#allocation7 + $0x68] sm:$0xf]
        %v493 = vld [vmem:[#allocation7 + $0x6c] sm:$0xf]
        %v494 = vld [vmem:[#allocation7 + $0x70] sm:$0xf]
        %v495 = vld [vmem:[#allocation7 + $0x74] sm:$0xf]
        %v496 = vld [vmem:[#allocation7 + $0x78] sm:$0xf]
        %v497 = vld [vmem:[#allocation7 + $0x7c] sm:$0xf]
        %v498 = vld [vmem:[%s4] sm:$0x1]
        %v500 = vlaneseq
        %v501 = vshrl.u32 %v500, 7
        %v502 = vsub.s32 0, %v501
        %v503 = vrot.slane %v498, %v502
        %v537 = vunpack.c.l.b16 %v466
        %v538 = vunpack.c.l.b16 %v467
        %v539 = vunpack.c.l.b16 %v468
        %v540 = vunpack.c.l.b16 %v469
        %v541 = vunpack.c.l.b16 %v470
        %v542 = vunpack.c.l.b16 %v471
        %v543 = vunpack.c.l.b16 %v472
        %v544 = vunpack.c.l.b16 %v473
        %v545 = vunpack.c.l.b16 %v474
        %v546 = vunpack.c.l.b16 %v475
        %v547 = vunpack.c.l.b16 %v476
        %v548 = vunpack.c.l.b16 %v477
        %v549 = vunpack.c.l.b16 %v478
        %v550 = vunpack.c.l.b16 %v479
        %v551 = vunpack.c.l.b16 %v480
        %v552 = vunpack.c.l.b16 %v481
        %v553 = vunpack.c.l.b16 %v482
        %v554 = vunpack.c.l.b16 %v483
        %v555 = vunpack.c.l.b16 %v484
        %v556 = vunpack.c.l.b16 %v485
        %v557 = vunpack.c.l.b16 %v486
        %v558 = vunpack.c.l.b16 %v487
        %v559 = vunpack.c.l.b16 %v488
        %v560 = vunpack.c.l.b16 %v489
        %v561 = vunpack.c.l.b16 %v490
        %v562 = vunpack.c.l.b16 %v491
        %v563 = vunpack.c.l.b16 %v492
        %v564 = vunpack.c.l.b16 %v493
        %v565 = vunpack.c.l.b16 %v494
        %v566 = vunpack.c.l.b16 %v495
        %v567 = vunpack.c.l.b16 %v496
        %v568 = vunpack.c.l.b16 %v497
        %v569 = vpack.c.b16 %v538, %v537
        %v570 = vpack.c.b16 %v540, %v539
        %v571 = vpack.c.b16 %v542, %v541
        %v572 = vpack.c.b16 %v544, %v543
        %v573 = vpack.c.b16 %v546, %v545
        %v574 = vpack.c.b16 %v548, %v547
        %v575 = vpack.c.b16 %v550, %v549
        %v576 = vpack.c.b16 %v552, %v551
        %v577 = vpack.c.b16 %v554, %v553
        %v578 = vpack.c.b16 %v556, %v555
        %v579 = vpack.c.b16 %v558, %v557
        %v580 = vpack.c.b16 %v560, %v559
        %v581 = vpack.c.b16 %v562, %v561
        %v582 = vpack.c.b16 %v564, %v563
        %v583 = vpack.c.b16 %v566, %v565
        %v584 = vpack.c.b16 %v568, %v567
        %601 = vmatprep.subr.bf16.mxu0 0
        %602 = vmatpush1.bf16.msra.mxu0 %v569
        %603 = vmatprep.subr.bf16.mxu0 0
        %604 = vmatpush1.bf16.msra.mxu0 %v570
        %605 = vmatprep.subr.bf16.mxu0 0
        %606 = vmatpush1.bf16.msra.mxu0 %v571
        %607 = vmatprep.subr.bf16.mxu0 0
        %608 = vmatpush1.bf16.msra.mxu0 %v572
        %609 = vmatprep.subr.bf16.mxu0 0
        %610 = vmatpush1.bf16.msra.mxu0 %v573
        %611 = vmatprep.subr.bf16.mxu0 0
        %612 = vmatpush1.bf16.msra.mxu0 %v574
        %613 = vmatprep.subr.bf16.mxu0 0
        %614 = vmatpush1.bf16.msra.mxu0 %v575
        %615 = vmatprep.subr.bf16.mxu0 0
        %616 = vmatpush1.bf16.msra.mxu0 %v576
        %617 = vmatprep.subr.bf16.mxu0 0
        %618 = vmatpush1.bf16.msra.mxu0 %v577
        %619 = vmatprep.subr.bf16.mxu0 0
        %620 = vmatpush1.bf16.msra.mxu0 %v578
        %621 = vmatprep.subr.bf16.mxu0 0
        %622 = vmatpush1.bf16.msra.mxu0 %v579
        %623 = vmatprep.subr.bf16.mxu0 0
        %624 = vmatpush1.bf16.msra.mxu0 %v580
        %625 = vmatprep.subr.bf16.mxu0 0
        %626 = vmatpush1.bf16.msra.mxu0 %v581
        %627 = vmatprep.subr.bf16.mxu0 0
        %628 = vmatpush1.bf16.msra.mxu0 %v582
        %629 = vmatprep.subr.bf16.mxu0 0
        %630 = vmatpush1.bf16.msra.mxu0 %v583
        %631 = vmatprep.subr.bf16.mxu0 0
        %632 = vmatpush1.bf16.msra.mxu0 %v584
        %633 = vmatprep.mubr.bf16.mxu0 %v465
        %634 = vmatmul.mubr.bf16.gmra.mrb[0].mxu0 %v464
        %v635 = vpop.f32.mrb[0].mxu0
        %v636 = vadd.f32 %v503, %v635
        %v637 = vpop.f32.mrb[0].mxu0
        %v638 = vpop.f32.mrb[0].mxu0
        %v639 = vpop.f32.mrb[0].mxu0
        %640 = vdwg.mxu0
        %v641 = vtanh.pop %v636
        %v642 = vmul.f32 %v641, 3.1415927
        %643 = vst [vmem:[%s299] sm:$0xff] %v642
        %v644 = vpack.c.bf16 %v642, %v642
        %645 = vst [vmem:[%s306] sm:$0xf] %v644
        %s646 = sand.u32 %s146, 1
        %s647 = scalar_lea.sflag [#allocation4], %s646
        %s648 = sand.u32 %s146, 1
        %s649 = smul.addr %s648, 8
        %s650 = scalar_lea.vmem [#allocation8], %s649
        %s651 = sand.u32 %s172, 1
        %s652 = scalar_lea.sflag [#allocation10], %s651
        %s653 = sand.u32 %s172, 1
        %s654 = smul.addr %s653, 4
        %s655 = scalar_lea.vmem [#allocation9], %s654
        // Predicated region
        $region53: #{tpu_custom_call.1} parent=39 // pred_check
          %p656 = pneg %p156
        $region54: #{tpu_custom_call.1} parent=39 // pred_check_branch
          %658 = sbr.rel (%p656) target = $region56
        $region55: #{tpu_custom_call.1} parent=39 // pred_region
          %s660 = ssub.s32 128, 128
          %661 = vsyncadd %s647, %s660
          %s662 = smul.addr %s28, 128
          %s663 = scalar_lea.hbm %s5, %s662
          %s665 = sshll.u32 %s650, 4
          %s666 = int_to_ptr.vmem [resolvable:$true] %s665
          %668 = dma.vmem_to_hbm [thread:$0]  %s666, 128, %s663, %s647
        $region56: #{tpu_custom_call.1} parent=39 // pred_fallthru
          _
        // Predicated region
        $region57: #{tpu_custom_call.1} parent=39 // pred_check
          %p669 = pneg %p182
        $region58: #{tpu_custom_call.1} parent=39 // pred_check_branch
          %671 = sbr.rel (%p669) target = $region60
        $region59: #{tpu_custom_call.1} parent=39 // pred_region
          %s673 = ssub.s32 64, 64
          %674 = vsyncadd %s652, %s673
          %s675 = smul.addr %s28, 64
          %s676 = scalar_lea.hbm %s6, %s675
          %s678 = sshll.u32 %s655, 4
          %s679 = int_to_ptr.vmem [resolvable:$true] %s678
          %681 = dma.vmem_to_hbm [thread:$0]  %s679, 64, %s676, %s652
        $region60: #{tpu_custom_call.1} parent=39 // pred_fallthru
          _
      $region40: #{tpu_custom_call.1} parent=5 // pred_fallthru
        _
      %p682 = scmp.le.s32.totalorder 2, %s23
      // Predicated region
      $region61: #{tpu_custom_call.1} parent=5 // pred_check
        %p683 = pneg %p682
      $region62: #{tpu_custom_call.1} parent=5 // pred_check_branch
        %685 = sbr.rel (%p683) target = $region64
      $region63: #{tpu_custom_call.1} parent=5 // pred_region
        %s686 = ssub.s32 %s23, 2
        // Predicated region
        $region65: #{tpu_custom_call.1} parent=63 // pred_check
          %p687 = pneg %p162
        $region66: #{tpu_custom_call.1} parent=63 // pred_check_branch
          %689 = sbr.rel (%p687) target = $region68
        $region67: #{tpu_custom_call.1} parent=63 // pred_region
          %s690 = sand.u32 %s147, 1
          %s691 = scalar_lea.sflag [#allocation4], %s690
          %s692 = sand.u32 %s147, 1
          %s693 = smul.addr %s692, 8
          %s694 = scalar_lea.vmem [#allocation8], %s693
          %695 = dma.done %s691, 128
        $region68: #{tpu_custom_call.1} parent=63 // pred_fallthru
          _
        // Predicated region
        $region69: #{tpu_custom_call.1} parent=63 // pred_check
          %p696 = pneg %p188
        $region70: #{tpu_custom_call.1} parent=63 // pred_check_branch
          %698 = sbr.rel (%p696) target = $region72
        $region71: #{tpu_custom_call.1} parent=63 // pred_region
          %s699 = sand.u32 %s173, 1
          %s700 = scalar_lea.sflag [#allocation10], %s699
          %s701 = sand.u32 %s173, 1
          %s702 = smul.addr %s701, 4
          %s703 = scalar_lea.vmem [#allocation9], %s702
          %704 = dma.done %s700, 64
        $region72: #{tpu_custom_call.1} parent=63 // pred_fallthru
          _
      $region64: #{tpu_custom_call.1} parent=5 // pred_fallthru
        _
    $region6: #{tpu_custom_call.1} parent=1 // loop_footer
      %s27 = sadd.s32 1, %s23
    $region7: #{tpu_custom_call.1} parent=1 // loop_footer_branch
      %22 = sbr.rel target = $region3
    $region8: #{tpu_custom_call.1} parent=1 // loop_exit
      _
    %705 = vsyncpa [#allocation3], 1
    %s706 = scalar_lea.sflag [#allocation3], 1
    %707 = vsyncpa %s706, 1
    %708 = vsyncpa [#allocation6], 1
    %709 = vsyncpa [#allocation4], 1
    %s710 = scalar_lea.sflag [#allocation4], 1
    %711 = vsyncpa %s710, 1
    %712 = vsyncpa [#allocation10], 1
    %s713 = scalar_lea.sflag [#allocation10], 1
    %714 = vsyncpa %s713, 1

</llo_original>
